<compile_context>
chip_gen: v6e
topology: v6e:2x2x1
jax: 0.10.0
libtpu: 0.0.40
codegen_flags: <defaults>
</compile_context>

<pallas_src>
import functools

import jax
import jax.numpy as jnp
from jax.experimental import pallas as pl
from jax.experimental.pallas import tpu as pltpu

INPUT_SIZE = 150
OUTPUT_SIZE = 7
HIDDEN = (256, 128, 64, 32)
BN_EPS = 1e-5

IN_PAD = 256    # input features padded 150 -> 256  (lane-aligned K for layer 1)
OUT_PAD = 128   # output cols padded 7 -> 128       (lane-dense unmasked stores)


def _round_up(n, m):
    return ((n + m - 1) // m) * m


def _mlp_kernel(x_ref,
                w1, b1, w2, b2, w3, b3, w4, b4, w5, b5,
                o_ref):
    """Fused forward: 4 x (Linear[BN folded in] + ReLU) + final Linear.

    Matmuls run on the MXU in the weights' dtype (f32 or bf16) with f32
    accumulation; bias add + ReLU stay in f32 on the VPU.
    """
    def layer(h, w_ref, b_ref, relu):
        w = w_ref[...]
        z = jnp.dot(h.astype(w.dtype), w, preferred_element_type=jnp.float32)
        z = z + b_ref[...]
        return jnp.maximum(z, 0.0) if relu else z

    h = x_ref[...]
    h = layer(h, w1, b1, True)
    h = layer(h, w2, b2, True)
    h = layer(h, w3, b3, True)
    h = layer(h, w4, b4, True)
    out = layer(h, w5, b5, False)
    o_ref[...] = out.astype(o_ref.dtype)


def init_params(key):
    """Deterministic parameter init (shapes match the PyTorch module)."""
    dims = (INPUT_SIZE,) + HIDDEN + (OUTPUT_SIZE,)
    params = []
    for i in range(len(dims) - 1):
        fan_in, fan_out = dims[i], dims[i + 1]
        key, kw, kb = jax.random.split(key, 3)
        bound = 1.0 / jnp.sqrt(fan_in)
        # stored (in, out): transpose of PyTorch's (out, in) Linear weight
        w = jax.random.uniform(kw, (fan_in, fan_out), jnp.float32, -bound, bound)
        b = jax.random.uniform(kb, (fan_out,), jnp.float32, -bound, bound)
        params.append((w, b.reshape(1, fan_out)))

    bn = []
    for h in HIDDEN:
        gamma = jnp.ones((h,), jnp.float32)
        beta = jnp.zeros((h,), jnp.float32)
        running_mean = jnp.zeros((h,), jnp.float32)
        running_var = jnp.ones((h,), jnp.float32)
        scale = gamma / jnp.sqrt(running_var + BN_EPS)
        shift = beta - running_mean * scale
        bn.append((scale.reshape(1, h), shift.reshape(1, h)))
    return params, bn


def prepare_params(params, bn, matmul_dtype=jnp.float32):
    """One-time constant prep outside the kernel:
       * fold eval-mode BatchNorm1d into the preceding Linear
       * zero-pad layer-1 K dim 150 -> 256 and layer-5 N dim 7 -> 128
       * cast weights to the matmul dtype (bf16 is the v6e/v7x fast path)
    Biases stay f32 (bias/ReLU run in f32)."""
    folded = []
    for (w, b), (s, t) in zip(params[:-1], bn):
        folded.append((w * s, b * s + t))
    folded.append(params[-1])

    w1, b1 = folded[0]
    folded[0] = (jnp.pad(w1, ((0, IN_PAD - INPUT_SIZE), (0, 0))), b1)

    w5, b5 = folded[-1]
    folded[-1] = (jnp.pad(w5, ((0, 0), (0, OUT_PAD - OUTPUT_SIZE))),
                  jnp.pad(b5, ((0, 0), (0, OUT_PAD - OUTPUT_SIZE))))

    return [(w.astype(matmul_dtype), b.astype(jnp.float32)) for w, b in folded]


@functools.partial(jax.jit, static_argnames=("batch_tile",))
def policy_network_forward(x, prepped, *, batch_tile=256):
    B, F = x.shape
    assert F == INPUT_SIZE

    # Tile choice: whole (8-row-rounded) batch as one block when B is small,
    # otherwise batch_tile rows per grid step.  On v7x keep B >= 2*batch_tile
    # so both TensorCores get grid steps under dimension_semantics=("parallel",).
    tile = min(batch_tile, _round_up(B, 8))
    grid = pl.cdiv(B, tile)
    Bp = grid * tile

    w_dtype = prepped[0][0].dtype
    xp = jnp.pad(x, ((0, Bp - B), (0, IN_PAD - F))).astype(w_dtype)

    operands = [xp]
    in_specs = [pl.BlockSpec((tile, IN_PAD), lambda i: (i, 0))]
    for w, b in prepped:
        operands += [w, b]
        # whole-array blocks, replicated across the batch grid (resident in VMEM)
        in_specs += [pl.BlockSpec(w.shape, lambda i: (0, 0)),
                     pl.BlockSpec(b.shape, lambda i: (0, 0))]

    out = pl.pallas_call(
        _mlp_kernel,
        out_shape=jax.ShapeDtypeStruct((Bp, OUT_PAD), jnp.float32),
        grid_spec=pltpu.PrefetchScalarGridSpec(
            num_scalar_prefetch=0,
            grid=(grid,),
            in_specs=in_specs,
            out_specs=pl.BlockSpec((tile, OUT_PAD), lambda i: (i, 0)),
        ),
        compiler_params=pltpu.CompilerParams(
            dimension_semantics=("parallel",)),
    )(*operands)

    return out[:B, :OUTPUT_SIZE]


def _reference_forward(x, params, bn):
    h = x
    for (w, b), (s, t) in zip(params[:-1], bn):
        h = jnp.maximum((h @ w + b) * s + t, 0.0)
    w, b = params[-1]
    return h @ w + b


if __name__ == "__main__":
    key = jax.random.PRNGKey(0)
    kp, kx, kx2 = jax.random.split(key, 3)
    params, bn = init_params(kp)

    # --- small batch (grid collapses to a single block) -------------------
    B = 8
    x = jax.random.normal(kx, (B, INPUT_SIZE), jnp.float32)
    ref = _reference_forward(x, params, bn)

    prepped_f32 = prepare_params(params, bn, jnp.float32)
    out_f32 = jax.block_until_ready(policy_network_forward(x, prepped_f32))
    assert out_f32.shape == (B, OUTPUT_SIZE)
    assert jnp.allclose(out_f32, ref, atol=1e-4, rtol=1e-4)

    # bf16-matmul fast path (v6e / v7x): f32 accumulation, looser tolerance
    prepped_bf16 = prepare_params(params, bn, jnp.bfloat16)
    out_bf16 = jax.block_until_ready(policy_network_forward(x, prepped_bf16))
    assert out_bf16.shape == (B, OUTPUT_SIZE)
    assert jnp.allclose(out_bf16, ref, atol=5e-2, rtol=5e-2)

    # --- larger, non-divisible batch (exercises padding + grid >= 2) ------
    B2 = 500
    x2 = jax.random.normal(kx2, (B2, INPUT_SIZE), jnp.float32)
    ref2 = _reference_forward(x2, params, bn)
    out2 = jax.block_until_ready(policy_network_forward(x2, prepped_f32,
                                                        batch_tile=256))
    assert out2.shape == (B2, OUTPUT_SIZE)
    assert jnp.allclose(out2, ref2, atol=1e-4, rtol=1e-4)

    print("KERNEL_OK")
</pallas_src>

<mosaic_0001>
module attributes {stable_mosaic.version = 11 : i64} {
  func.func @_mlp_kernel(%arg0: i32, %arg1: memref<8x256xf32, #tpu.memory_space<vmem>>, %arg2: memref<256x256xf32, #tpu.memory_space<vmem>>, %arg3: memref<1x256xf32, #tpu.memory_space<vmem>>, %arg4: memref<256x128xf32, #tpu.memory_space<vmem>>, %arg5: memref<1x128xf32, #tpu.memory_space<vmem>>, %arg6: memref<128x64xf32, #tpu.memory_space<vmem>>, %arg7: memref<1x64xf32, #tpu.memory_space<vmem>>, %arg8: memref<64x32xf32, #tpu.memory_space<vmem>>, %arg9: memref<1x32xf32, #tpu.memory_space<vmem>>, %arg10: memref<32x128xf32, #tpu.memory_space<vmem>>, %arg11: memref<1x128xf32, #tpu.memory_space<vmem>>, %arg12: memref<8x128xf32, #tpu.memory_space<vmem>>) attributes {dimension_semantics = [#tpu.dimension_semantics<parallel>], iteration_bounds = array<i64: 1>, scalar_prefetch = 0 : i64, scratch_operands = 0 : i64, tpu.core_type = #tpu.core_type<tc>, window_params = [{transform_indices = @transform_0, window_bounds = array<i64: 8, 256>}, {pipeline_mode = #tpu.pipeline_mode<synchronous>, transform_indices = @transform_1, window_bounds = array<i64: 256, 256>}, {pipeline_mode = #tpu.pipeline_mode<synchronous>, transform_indices = @transform_2, window_bounds = array<i64: 1, 256>}, {pipeline_mode = #tpu.pipeline_mode<synchronous>, transform_indices = @transform_3, window_bounds = array<i64: 256, 128>}, {pipeline_mode = #tpu.pipeline_mode<synchronous>, transform_indices = @transform_4, window_bounds = array<i64: 1, 128>}, {pipeline_mode = #tpu.pipeline_mode<synchronous>, transform_indices = @transform_5, window_bounds = array<i64: 128, 64>}, {pipeline_mode = #tpu.pipeline_mode<synchronous>, transform_indices = @transform_6, window_bounds = array<i64: 1, 64>}, {pipeline_mode = #tpu.pipeline_mode<synchronous>, transform_indices = @transform_7, window_bounds = array<i64: 64, 32>}, {pipeline_mode = #tpu.pipeline_mode<synchronous>, transform_indices = @transform_8, window_bounds = array<i64: 1, 32>}, {pipeline_mode = #tpu.pipeline_mode<synchronous>, transform_indices = @transform_9, window_bounds = array<i64: 32, 128>}, {pipeline_mode = #tpu.pipeline_mode<synchronous>, transform_indices = @transform_10, window_bounds = array<i64: 1, 128>}, {transform_indices = @transform_11, window_bounds = array<i64: 8, 128>}]} {
    %c0 = arith.constant 0 : index
    %c0_0 = arith.constant 0 : index
    %0 = vector.load %arg1[%c0, %c0_0] : memref<8x256xf32, #tpu.memory_space<vmem>>, vector<8x256xf32>
    %c0_1 = arith.constant 0 : index
    %c0_2 = arith.constant 0 : index
    %1 = vector.load %arg2[%c0_1, %c0_2] : memref<256x256xf32, #tpu.memory_space<vmem>>, vector<256x256xf32>
    %cst = arith.constant dense<0.000000e+00> : vector<8x256xf32>
    %2 = tpu.matmul %0, %1, %cst {dimension_numbers = #tpu.dot_dimension_numbers<[1], [0], [0], [1], [0, 0, 1, 1], [], []>} : vector<8x256xf32>, vector<256x256xf32>, vector<8x256xf32> -> vector<8x256xf32>
    %c0_3 = arith.constant 0 : index
    %c0_4 = arith.constant 0 : index
    %3 = vector.load %arg3[%c0_3, %c0_4] : memref<1x256xf32, #tpu.memory_space<vmem>>, vector<1x256xf32>
    %4 = vector.broadcast %3 : vector<1x256xf32> to vector<8x256xf32>
    %5 = arith.addf %2, %4 : vector<8x256xf32>
    %cst_5 = arith.constant 0.000000e+00 : f32
    %6 = vector.broadcast %cst_5 : f32 to vector<8x256xf32>
    %7 = arith.maximumf %5, %6 : vector<8x256xf32>
    %c0_6 = arith.constant 0 : index
    %c0_7 = arith.constant 0 : index
    %8 = vector.load %arg4[%c0_6, %c0_7] : memref<256x128xf32, #tpu.memory_space<vmem>>, vector<256x128xf32>
    %cst_8 = arith.constant dense<0.000000e+00> : vector<8x128xf32>
    %9 = tpu.matmul %7, %8, %cst_8 {dimension_numbers = #tpu.dot_dimension_numbers<[1], [0], [0], [1], [0, 0, 1, 1], [], []>} : vector<8x256xf32>, vector<256x128xf32>, vector<8x128xf32> -> vector<8x128xf32>
    %c0_9 = arith.constant 0 : index
    %c0_10 = arith.constant 0 : index
    %10 = vector.load %arg5[%c0_9, %c0_10] : memref<1x128xf32, #tpu.memory_space<vmem>>, vector<1x128xf32>
    %11 = vector.broadcast %10 : vector<1x128xf32> to vector<8x128xf32>
    %12 = arith.addf %9, %11 : vector<8x128xf32>
    %cst_11 = arith.constant 0.000000e+00 : f32
    %13 = vector.broadcast %cst_11 : f32 to vector<8x128xf32>
    %14 = arith.maximumf %12, %13 : vector<8x128xf32>
    %c0_12 = arith.constant 0 : index
    %c0_13 = arith.constant 0 : index
    %15 = vector.load %arg6[%c0_12, %c0_13] : memref<128x64xf32, #tpu.memory_space<vmem>>, vector<128x64xf32>
    %cst_14 = arith.constant dense<0.000000e+00> : vector<8x64xf32>
    %16 = tpu.matmul %14, %15, %cst_14 {dimension_numbers = #tpu.dot_dimension_numbers<[1], [0], [0], [1], [0, 0, 1, 1], [], []>} : vector<8x128xf32>, vector<128x64xf32>, vector<8x64xf32> -> vector<8x64xf32>
    %c0_15 = arith.constant 0 : index
    %c0_16 = arith.constant 0 : index
    %17 = vector.load %arg7[%c0_15, %c0_16] : memref<1x64xf32, #tpu.memory_space<vmem>>, vector<1x64xf32>
    %18 = vector.broadcast %17 : vector<1x64xf32> to vector<8x64xf32>
    %19 = arith.addf %16, %18 : vector<8x64xf32>
    %cst_17 = arith.constant 0.000000e+00 : f32
    %20 = vector.broadcast %cst_17 : f32 to vector<8x64xf32>
    %21 = arith.maximumf %19, %20 : vector<8x64xf32>
    %c0_18 = arith.constant 0 : index
    %c0_19 = arith.constant 0 : index
    %22 = vector.load %arg8[%c0_18, %c0_19] : memref<64x32xf32, #tpu.memory_space<vmem>>, vector<64x32xf32>
    %cst_20 = arith.constant dense<0.000000e+00> : vector<8x32xf32>
    %23 = tpu.matmul %21, %22, %cst_20 {dimension_numbers = #tpu.dot_dimension_numbers<[1], [0], [0], [1], [0, 0, 1, 1], [], []>} : vector<8x64xf32>, vector<64x32xf32>, vector<8x32xf32> -> vector<8x32xf32>
    %c0_21 = arith.constant 0 : index
    %c0_22 = arith.constant 0 : index
    %24 = vector.load %arg9[%c0_21, %c0_22] : memref<1x32xf32, #tpu.memory_space<vmem>>, vector<1x32xf32>
    %25 = vector.broadcast %24 : vector<1x32xf32> to vector<8x32xf32>
    %26 = arith.addf %23, %25 : vector<8x32xf32>
    %cst_23 = arith.constant 0.000000e+00 : f32
    %27 = vector.broadcast %cst_23 : f32 to vector<8x32xf32>
    %28 = arith.maximumf %26, %27 : vector<8x32xf32>
    %c0_24 = arith.constant 0 : index
    %c0_25 = arith.constant 0 : index
    %29 = vector.load %arg10[%c0_24, %c0_25] : memref<32x128xf32, #tpu.memory_space<vmem>>, vector<32x128xf32>
    %cst_26 = arith.constant dense<0.000000e+00> : vector<8x128xf32>
    %30 = tpu.matmul %28, %29, %cst_26 {dimension_numbers = #tpu.dot_dimension_numbers<[1], [0], [0], [1], [0, 0, 1, 1], [], []>} : vector<8x32xf32>, vector<32x128xf32>, vector<8x128xf32> -> vector<8x128xf32>
    %c0_27 = arith.constant 0 : index
    %c0_28 = arith.constant 0 : index
    %31 = vector.load %arg11[%c0_27, %c0_28] : memref<1x128xf32, #tpu.memory_space<vmem>>, vector<1x128xf32>
    %32 = vector.broadcast %31 : vector<1x128xf32> to vector<8x128xf32>
    %33 = arith.addf %30, %32 : vector<8x128xf32>
    %c0_29 = arith.constant 0 : index
    %c0_30 = arith.constant 0 : index
    %34 = vector.load %arg12[%c0_29, %c0_30] : memref<8x128xf32, #tpu.memory_space<vmem>>, vector<8x128xf32>
    tpu.vector_store %arg12[%c0_29, %c0_30], %33 {strides = array<i32>} : memref<8x128xf32, #tpu.memory_space<vmem>>, vector<8x128xf32>,
    return
  }
  func.func @transform_0(%arg0: i32) -> (i32, i32) {
    %c0_i32 = arith.constant 0 : i32
    %c0_i32_0 = arith.constant 0 : i32
    return %arg0, %c0_i32 : i32, i32
  }
  func.func @transform_1(%arg0: i32) -> (i32, i32) {
    %c0_i32 = arith.constant 0 : i32
    %c0_i32_0 = arith.constant 0 : i32
    %c0_i32_1 = arith.constant 0 : i32
    return %c0_i32, %c0_i32_0 : i32, i32
  }
  func.func @transform_2(%arg0: i32) -> (i32, i32) {
    %c0_i32 = arith.constant 0 : i32
    %c0_i32_0 = arith.constant 0 : i32
    %c0_i32_1 = arith.constant 0 : i32
    return %c0_i32, %c0_i32_0 : i32, i32
  }
  func.func @transform_3(%arg0: i32) -> (i32, i32) {
    %c0_i32 = arith.constant 0 : i32
    %c0_i32_0 = arith.constant 0 : i32
    %c0_i32_1 = arith.constant 0 : i32
    return %c0_i32, %c0_i32_0 : i32, i32
  }
  func.func @transform_4(%arg0: i32) -> (i32, i32) {
    %c0_i32 = arith.constant 0 : i32
    %c0_i32_0 = arith.constant 0 : i32
    %c0_i32_1 = arith.constant 0 : i32
    return %c0_i32, %c0_i32_0 : i32, i32
  }
  func.func @transform_5(%arg0: i32) -> (i32, i32) {
    %c0_i32 = arith.constant 0 : i32
    %c0_i32_0 = arith.constant 0 : i32
    %c0_i32_1 = arith.constant 0 : i32
    return %c0_i32, %c0_i32_0 : i32, i32
  }
  func.func @transform_6(%arg0: i32) -> (i32, i32) {
    %c0_i32 = arith.constant 0 : i32
    %c0_i32_0 = arith.constant 0 : i32
    %c0_i32_1 = arith.constant 0 : i32
    return %c0_i32, %c0_i32_0 : i32, i32
  }
  func.func @transform_7(%arg0: i32) -> (i32, i32) {
    %c0_i32 = arith.constant 0 : i32
    %c0_i32_0 = arith.constant 0 : i32
    %c0_i32_1 = arith.constant 0 : i32
    return %c0_i32, %c0_i32_0 : i32, i32
  }
  func.func @transform_8(%arg0: i32) -> (i32, i32) {
    %c0_i32 = arith.constant 0 : i32
    %c0_i32_0 = arith.constant 0 : i32
    %c0_i32_1 = arith.constant 0 : i32
    return %c0_i32, %c0_i32_0 : i32, i32
  }
  func.func @transform_9(%arg0: i32) -> (i32, i32) {
    %c0_i32 = arith.constant 0 : i32
    %c0_i32_0 = arith.constant 0 : i32
    %c0_i32_1 = arith.constant 0 : i32
    return %c0_i32, %c0_i32_0 : i32, i32
  }
  func.func @transform_10(%arg0: i32) -> (i32, i32) {
    %c0_i32 = arith.constant 0 : i32
    %c0_i32_0 = arith.constant 0 : i32
    %c0_i32_1 = arith.constant 0 : i32
    return %c0_i32, %c0_i32_0 : i32, i32
  }
  func.func @transform_11(%arg0: i32) -> (i32, i32) {
    %c0_i32 = arith.constant 0 : i32
    %c0_i32_0 = arith.constant 0 : i32
    return %arg0, %c0_i32 : i32, i32
  }
}

</mosaic_0001>

<llo_original>
// kernel: policy_network_forward.1
$region0: #{policy_network_forward.1}
  #allocation0 [shape = 'u32[]', space=smem, size = 0x4, offset = 0x4, fixed_abs, tag = 'smem constant byte address 0x4 - core index']
  #allocation1 [shape = 'u32[144,128]{1,0:T(1,128)}', space=vmem, size = 0x12000, scoped, tag = 'internal scratch']
  %s0 = inlined_call_operand.vmem [shape: f32[8,256], index: 0, kind: input, shape index: {}]
  %s1 = inlined_call_operand.hbm [shape: f32[256,256], index: 1, kind: input, shape index: {}]
  %s2 = inlined_call_operand.vmem [shape: f32[1,256], index: 2, kind: input, shape index: {}]
  %s3 = inlined_call_operand.vmem [shape: f32[256,128], index: 3, kind: input, shape index: {}]
  %s4 = inlined_call_operand.vmem [shape: f32[1,128], index: 4, kind: input, shape index: {}]
  %s5 = inlined_call_operand.vmem [shape: f32[128,64], index: 5, kind: input, shape index: {}]
  %s6 = inlined_call_operand.vmem [shape: f32[1,64], index: 6, kind: input, shape index: {}]
  %s7 = inlined_call_operand.vmem [shape: f32[64,32], index: 7, kind: input, shape index: {}]
  %s8 = inlined_call_operand.vmem [shape: f32[1,32], index: 8, kind: input, shape index: {}]
  %s9 = inlined_call_operand.hbm [shape: f32[32,128], index: 9, kind: input, shape index: {}]
  %s10 = inlined_call_operand.vmem [shape: f32[1,128], index: 10, kind: input, shape index: {}]
  %s11 = inlined_call_operand.hbm [shape: f32[8,128], index: 11, kind: output, shape index: {}]
  %s12 = sld [smem:[#allocation0]]
  $region62: #{policy_network_forward.1} parent=0
    _
  %s14 = ssub.s32 1, %s12
  %s15 = scalar_select 0, %s14, %s12
  $region1: #{policy_network_forward.1} parent=0
    #allocation2 [shape = 'u8[262144]{0}', space=vmem, size = 0x40000, scoped, tag = 'input window, operand 1, single buffered']
    #allocation3 [shape = 's32[1]{0}', space=sflag, size = 0x4, scoped, tag = 'scoped memory for policy_network_forward.1']
    #allocation4 [shape = 's32[1]{0}', space=sflag, size = 0x4, scoped, tag = 'scoped memory for policy_network_forward.1']
    #allocation5 [shape = 'u8[16384]{0}', space=vmem, size = 0x4000, scoped, tag = 'input window, operand 9, single buffered']
    #allocation6 [shape = 's32[1]{0}', space=sflag, size = 0x4, scoped, tag = 'scoped memory for policy_network_forward.1']
    #allocation7 [shape = 'u8[4096]{0}', space=vmem, size = 0x1000, scoped, tag = 'output window, operand 0, single buffered']
    %16 = vsyncpa [#allocation3], 0
    %17 = vsyncpa [#allocation6], 0
    %18 = vsyncpa [#allocation4], 0
    // Predicated region
    $region2: #{policy_network_forward.1} parent=1 // pred_check
      _
    $region3: #{policy_network_forward.1} parent=1 // pred_check_branch
      %20 = sbr.rel (0) target = $region5
    $region4: #{policy_network_forward.1} parent=1 // pred_region
      _
    $region5: #{policy_network_forward.1} parent=1 // pred_fallthru
      _
    // Predicated region
    $region6: #{policy_network_forward.1} parent=1 // pred_check
      _
    $region7: #{policy_network_forward.1} parent=1 // pred_check_branch
      %22 = sbr.rel (0) target = $region9
    $region8: #{policy_network_forward.1} parent=1 // pred_region
      %s24 = ssub.s32 8192, 8192
      %25 = vsyncadd [#allocation3], %s24
      %s26 = sshll.u32 [#allocation2], 4
      %s27 = int_to_ptr.vmem [resolvable:$true] %s26
      %32 = dma.hbm_to_vmem [thread:$0]  %s1, 8192, %s27, [#allocation3], 256, 256, 16
    $region9: #{policy_network_forward.1} parent=1 // pred_fallthru
      _
    // Predicated region
    $region10: #{policy_network_forward.1} parent=1 // pred_check
      _
    $region11: #{policy_network_forward.1} parent=1 // pred_check_branch
      %34 = sbr.rel (0) target = $region13
    $region12: #{policy_network_forward.1} parent=1 // pred_region
      _
    $region13: #{policy_network_forward.1} parent=1 // pred_fallthru
      _
    // Predicated region
    $region14: #{policy_network_forward.1} parent=1 // pred_check
      _
    $region15: #{policy_network_forward.1} parent=1 // pred_check_branch
      %36 = sbr.rel (0) target = $region17
    $region16: #{policy_network_forward.1} parent=1 // pred_region
      _
    $region17: #{policy_network_forward.1} parent=1 // pred_fallthru
      _
    // Predicated region
    $region18: #{policy_network_forward.1} parent=1 // pred_check
      _
    $region19: #{policy_network_forward.1} parent=1 // pred_check_branch
      %38 = sbr.rel (0) target = $region21
    $region20: #{policy_network_forward.1} parent=1 // pred_region
      _
    $region21: #{policy_network_forward.1} parent=1 // pred_fallthru
      _
    // Predicated region
    $region22: #{policy_network_forward.1} parent=1 // pred_check
      _
    $region23: #{policy_network_forward.1} parent=1 // pred_check_branch
      %40 = sbr.rel (0) target = $region25
    $region24: #{policy_network_forward.1} parent=1 // pred_region
      _
    $region25: #{policy_network_forward.1} parent=1 // pred_fallthru
      _
    // Predicated region
    $region26: #{policy_network_forward.1} parent=1 // pred_check
      _
    $region27: #{policy_network_forward.1} parent=1 // pred_check_branch
      %42 = sbr.rel (0) target = $region29
    $region28: #{policy_network_forward.1} parent=1 // pred_region
      _
    $region29: #{policy_network_forward.1} parent=1 // pred_fallthru
      _
    // Predicated region
    $region30: #{policy_network_forward.1} parent=1 // pred_check
      _
    $region31: #{policy_network_forward.1} parent=1 // pred_check_branch
      %44 = sbr.rel (0) target = $region33
    $region32: #{policy_network_forward.1} parent=1 // pred_region
      _
    $region33: #{policy_network_forward.1} parent=1 // pred_fallthru
      _
    // Predicated region
    $region34: #{policy_network_forward.1} parent=1 // pred_check
      _
    $region35: #{policy_network_forward.1} parent=1 // pred_check_branch
      %46 = sbr.rel (0) target = $region37
    $region36: #{policy_network_forward.1} parent=1 // pred_region
      _
    $region37: #{policy_network_forward.1} parent=1 // pred_fallthru
      _
    // Predicated region
    $region38: #{policy_network_forward.1} parent=1 // pred_check
      _
    $region39: #{policy_network_forward.1} parent=1 // pred_check_branch
      %48 = sbr.rel (0) target = $region41
    $region40: #{policy_network_forward.1} parent=1 // pred_region
      %s50 = ssub.s32 512, 512
      %51 = vsyncadd [#allocation6], %s50
      %s52 = sshll.u32 [#allocation5], 4
      %s53 = int_to_ptr.vmem [resolvable:$true] %s52
      %58 = dma.hbm_to_vmem [thread:$0]  %s9, 512, %s53, [#allocation6], 128, 128, 8
    $region41: #{policy_network_forward.1} parent=1 // pred_fallthru
      _
    // Predicated region
    $region42: #{policy_network_forward.1} parent=1 // pred_check
      _
    $region43: #{policy_network_forward.1} parent=1 // pred_check_branch
      %60 = sbr.rel (0) target = $region45
    $region44: #{policy_network_forward.1} parent=1 // pred_region
      _
    $region45: #{policy_network_forward.1} parent=1 // pred_fallthru
      _
    // Predicated region
    $region46: #{policy_network_forward.1} parent=1 // pred_check
      _
    $region47: #{policy_network_forward.1} parent=1 // pred_check_branch
      %62 = sbr.rel (0) target = $region49
    $region48: #{policy_network_forward.1} parent=1 // pred_region
      %63 = dma.done [#allocation3], 8192
    $region49: #{policy_network_forward.1} parent=1 // pred_fallthru
      _
    // Predicated region
    $region50: #{policy_network_forward.1} parent=1 // pred_check
      _
    $region51: #{policy_network_forward.1} parent=1 // pred_check_branch
      %65 = sbr.rel (0) target = $region53
    $region52: #{policy_network_forward.1} parent=1 // pred_region
      %66 = dma.done [#allocation6], 512
    $region53: #{policy_network_forward.1} parent=1 // pred_fallthru
      _
    %v67 = vld [vmem:[%s0] sm:$0xff]
    %v68 = vld [vmem:[%s0 + $0x8] sm:$0xff]
    %v69 = vld [vmem:[#allocation2] sm:$0xff]
    %v70 = vld [vmem:[#allocation2 + $0x8] sm:$0xff]
    %v71 = vld [vmem:[#allocation2 + $0x10] sm:$0xff]
    %v72 = vld [vmem:[#allocation2 + $0x18] sm:$0xff]
    %v73 = vld [vmem:[#allocation2 + $0x20] sm:$0xff]
    %v74 = vld [vmem:[#allocation2 + $0x28] sm:$0xff]
    %v75 = vld [vmem:[#allocation2 + $0x30] sm:$0xff]
    %v76 = vld [vmem:[#allocation2 + $0x38] sm:$0xff]
    %v77 = vld [vmem:[#allocation2 + $0x40] sm:$0xff]
    %v78 = vld [vmem:[#allocation2 + $0x48] sm:$0xff]
    %v79 = vld [vmem:[#allocation2 + $0x50] sm:$0xff]
    %v80 = vld [vmem:[#allocation2 + $0x58] sm:$0xff]
    %v81 = vld [vmem:[#allocation2 + $0x60] sm:$0xff]
    %v82 = vld [vmem:[#allocation2 + $0x68] sm:$0xff]
    %v83 = vld [vmem:[#allocation2 + $0x70] sm:$0xff]
    %v84 = vld [vmem:[#allocation2 + $0x78] sm:$0xff]
    %v85 = vld [vmem:[#allocation2 + $0x80] sm:$0xff]
    %v86 = vld [vmem:[#allocation2 + $0x88] sm:$0xff]
    %v87 = vld [vmem:[#allocation2 + $0x90] sm:$0xff]
    %v88 = vld [vmem:[#allocation2 + $0x98] sm:$0xff]
    %v89 = vld [vmem:[#allocation2 + $0xa0] sm:$0xff]
    %v90 = vld [vmem:[#allocation2 + $0xa8] sm:$0xff]
    %v91 = vld [vmem:[#allocation2 + $0xb0] sm:$0xff]
    %v92 = vld [vmem:[#allocation2 + $0xb8] sm:$0xff]
    %v93 = vld [vmem:[#allocation2 + $0xc0] sm:$0xff]
    %v94 = vld [vmem:[#allocation2 + $0xc8] sm:$0xff]
    %v95 = vld [vmem:[#allocation2 + $0xd0] sm:$0xff]
    %v96 = vld [vmem:[#allocation2 + $0xd8] sm:$0xff]
    %v97 = vld [vmem:[#allocation2 + $0xe0] sm:$0xff]
    %v98 = vld [vmem:[#allocation2 + $0xe8] sm:$0xff]
    %v99 = vld [vmem:[#allocation2 + $0xf0] sm:$0xff]
    %v100 = vld [vmem:[#allocation2 + $0xf8] sm:$0xff]
    %v101 = vld [vmem:[#allocation2 + $0x100] sm:$0xff]
    %v102 = vld [vmem:[#allocation2 + $0x108] sm:$0xff]
    %v103 = vld [vmem:[#allocation2 + $0x110] sm:$0xff]
    %v104 = vld [vmem:[#allocation2 + $0x118] sm:$0xff]
    %v105 = vld [vmem:[#allocation2 + $0x120] sm:$0xff]
    %v106 = vld [vmem:[#allocation2 + $0x128] sm:$0xff]
    %v107 = vld [vmem:[#allocation2 + $0x130] sm:$0xff]
    %v108 = vld [vmem:[#allocation2 + $0x138] sm:$0xff]
    %v109 = vld [vmem:[#allocation2 + $0x140] sm:$0xff]
    %v110 = vld [vmem:[#allocation2 + $0x148] sm:$0xff]
    %v111 = vld [vmem:[#allocation2 + $0x150] sm:$0xff]
    %v112 = vld [vmem:[#allocation2 + $0x158] sm:$0xff]
    %v113 = vld [vmem:[#allocation2 + $0x160] sm:$0xff]
    %v114 = vld [vmem:[#allocation2 + $0x168] sm:$0xff]
    %v115 = vld [vmem:[#allocation2 + $0x170] sm:$0xff]
    %v116 = vld [vmem:[#allocation2 + $0x178] sm:$0xff]
    %v117 = vld [vmem:[#allocation2 + $0x180] sm:$0xff]
    %v118 = vld [vmem:[#allocation2 + $0x188] sm:$0xff]
    %v119 = vld [vmem:[#allocation2 + $0x190] sm:$0xff]
    %v120 = vld [vmem:[#allocation2 + $0x198] sm:$0xff]
    %v121 = vld [vmem:[#allocation2 + $0x1a0] sm:$0xff]
    %v122 = vld [vmem:[#allocation2 + $0x1a8] sm:$0xff]
    %v123 = vld [vmem:[#allocation2 + $0x1b0] sm:$0xff]
    %v124 = vld [vmem:[#allocation2 + $0x1b8] sm:$0xff]
    %v125 = vld [vmem:[#allocation2 + $0x1c0] sm:$0xff]
    %v126 = vld [vmem:[#allocation2 + $0x1c8] sm:$0xff]
    %v127 = vld [vmem:[#allocation2 + $0x1d0] sm:$0xff]
    %v128 = vld [vmem:[#allocation2 + $0x1d8] sm:$0xff]
    %v129 = vld [vmem:[#allocation2 + $0x1e0] sm:$0xff]
    %v130 = vld [vmem:[#allocation2 + $0x1e8] sm:$0xff]
    %v131 = vld [vmem:[#allocation2 + $0x1f0] sm:$0xff]
    %v132 = vld [vmem:[#allocation2 + $0x1f8] sm:$0xff]
    %v133 = vld [vmem:[%s2] sm:$0x3]
    %v135 = vlaneseq
    %v136 = vshrl.u32 %v135, 7
    %v137 = vsub.s32 0, %v136
    %v138 = vrot.slane %v133, %v137
    %v139 = vlaneseq
    %v140 = vshrl.u32 %v139, 7
    %v141 = vsub.s32 1, %v140
    %v142 = vrot.slane %v133, %v141
    %145 = vmatprep.subr.mxu0 %v100
    %146 = vmatpush1.msra.mxu0 %v99
    %147 = vmatprep.subr.mxu0 %v98
    %148 = vmatpush1.msra.mxu0 %v97
    %149 = vmatprep.subr.mxu0 %v96
    %150 = vmatpush1.msra.mxu0 %v95
    %151 = vmatprep.subr.mxu0 %v94
    %152 = vmatpush1.msra.mxu0 %v93
    %153 = vmatprep.subr.mxu0 %v92
    %154 = vmatpush1.msra.mxu0 %v91
    %155 = vmatprep.subr.mxu0 %v90
    %156 = vmatpush1.msra.mxu0 %v89
    %157 = vmatprep.subr.mxu0 %v88
    %158 = vmatpush1.msra.mxu0 %v87
    %159 = vmatprep.subr.mxu0 %v86
    %160 = vmatpush1.msra.mxu0 %v85
    %161 = vmatprep.subr.mxu0 %v84
    %162 = vmatpush1.msra.mxu0 %v83
    %163 = vmatprep.subr.mxu0 %v82
    %164 = vmatpush1.msra.mxu0 %v81
    %165 = vmatprep.subr.mxu0 %v80
    %166 = vmatpush1.msra.mxu0 %v79
    %167 = vmatprep.subr.mxu0 %v78
    %168 = vmatpush1.msra.mxu0 %v77
    %169 = vmatprep.subr.mxu0 %v76
    %170 = vmatpush1.msra.mxu0 %v75
    %171 = vmatprep.subr.mxu0 %v74
    %172 = vmatpush1.msra.mxu0 %v73
    %173 = vmatprep.subr.mxu0 %v72
    %174 = vmatpush1.msra.mxu0 %v71
    %175 = vmatprep.subr.mxu0 %v70
    %176 = vmatpush1.msra.mxu0 %v69
    %177 = vmatprep.subr.mxu0 %v132
    %178 = vmatpush2.msra.mxu0 %v131
    %179 = vmatprep.subr.mxu0 %v130
    %180 = vmatpush2.msra.mxu0 %v129
    %181 = vmatprep.subr.mxu0 %v128
    %182 = vmatpush2.msra.mxu0 %v127
    %183 = vmatprep.subr.mxu0 %v126
    %184 = vmatpush2.msra.mxu0 %v125
    %185 = vmatprep.subr.mxu0 %v124
    %186 = vmatpush2.msra.mxu0 %v123
    %187 = vmatprep.subr.mxu0 %v122
    %188 = vmatpush2.msra.mxu0 %v121
    %189 = vmatprep.subr.mxu0 %v120
    %190 = vmatpush2.msra.mxu0 %v119
    %191 = vmatprep.subr.mxu0 %v118
    %192 = vmatpush2.msra.mxu0 %v117
    %193 = vmatprep.subr.mxu0 %v116
    %194 = vmatpush2.msra.mxu0 %v115
    %195 = vmatprep.subr.mxu0 %v114
    %196 = vmatpush2.msra.mxu0 %v113
    %197 = vmatprep.subr.mxu0 %v112
    %198 = vmatpush2.msra.mxu0 %v111
    %199 = vmatprep.subr.mxu0 %v110
    %200 = vmatpush2.msra.mxu0 %v109
    %201 = vmatprep.subr.mxu0 %v108
    %202 = vmatpush2.msra.mxu0 %v107
    %203 = vmatprep.subr.mxu0 %v106
    %204 = vmatpush2.msra.mxu0 %v105
    %205 = vmatprep.subr.mxu0 %v104
    %206 = vmatpush2.msra.mxu0 %v103
    %207 = vmatprep.subr.mxu0 %v102
    %208 = vmatpush2.msra.mxu0 %v101
    %209 = vmatprep.mubr.f32.mxu0 %v68
    %210 = vmatmul.mubr.f32.gmra.mxu0 %v67
    %v211 = vpop.f32.mrf.mxu0
    %v212 = vadd.f32 %v138, %v211
    %v213 = vpop.f32.mrf.mxu0
    %v214 = vadd.f32 %v142, %v213
    %215 = vdwg.mxu0
    %v216 = vmax.f32 %v212, 0.0
    %v217 = vmax.f32 %v214, 0.0
    %v218 = vld [vmem:[%s3] sm:$0xff]
    %v219 = vld [vmem:[%s3 + $0x8] sm:$0xff]
    %v220 = vld [vmem:[%s3 + $0x10] sm:$0xff]
    %v221 = vld [vmem:[%s3 + $0x18] sm:$0xff]
    %v222 = vld [vmem:[%s3 + $0x20] sm:$0xff]
    %v223 = vld [vmem:[%s3 + $0x28] sm:$0xff]
    %v224 = vld [vmem:[%s3 + $0x30] sm:$0xff]
    %v225 = vld [vmem:[%s3 + $0x38] sm:$0xff]
    %v226 = vld [vmem:[%s3 + $0x40] sm:$0xff]
    %v227 = vld [vmem:[%s3 + $0x48] sm:$0xff]
    %v228 = vld [vmem:[%s3 + $0x50] sm:$0xff]
    %v229 = vld [vmem:[%s3 + $0x58] sm:$0xff]
    %v230 = vld [vmem:[%s3 + $0x60] sm:$0xff]
    %v231 = vld [vmem:[%s3 + $0x68] sm:$0xff]
    %v232 = vld [vmem:[%s3 + $0x70] sm:$0xff]
    %v233 = vld [vmem:[%s3 + $0x78] sm:$0xff]
    %v234 = vld [vmem:[%s3 + $0x80] sm:$0xff]
    %v235 = vld [vmem:[%s3 + $0x88] sm:$0xff]
    %v236 = vld [vmem:[%s3 + $0x90] sm:$0xff]
    %v237 = vld [vmem:[%s3 + $0x98] sm:$0xff]
    %v238 = vld [vmem:[%s3 + $0xa0] sm:$0xff]
    %v239 = vld [vmem:[%s3 + $0xa8] sm:$0xff]
    %v240 = vld [vmem:[%s3 + $0xb0] sm:$0xff]
    %v241 = vld [vmem:[%s3 + $0xb8] sm:$0xff]
    %v242 = vld [vmem:[%s3 + $0xc0] sm:$0xff]
    %v243 = vld [vmem:[%s3 + $0xc8] sm:$0xff]
    %v244 = vld [vmem:[%s3 + $0xd0] sm:$0xff]
    %v245 = vld [vmem:[%s3 + $0xd8] sm:$0xff]
    %v246 = vld [vmem:[%s3 + $0xe0] sm:$0xff]
    %v247 = vld [vmem:[%s3 + $0xe8] sm:$0xff]
    %v248 = vld [vmem:[%s3 + $0xf0] sm:$0xff]
    %v249 = vld [vmem:[%s3 + $0xf8] sm:$0xff]
    %v250 = vld [vmem:[%s4] sm:$0x1]
    %v252 = vlaneseq
    %v253 = vshrl.u32 %v252, 7
    %v254 = vsub.s32 0, %v253
    %v255 = vrot.slane %v250, %v254
    %257 = vmatprep.subr.mxu0 0.0
    %258 = vmatpush1.msra.mxu0 %v233
    %259 = vmatprep.subr.mxu0 0.0
    %260 = vmatpush1.msra.mxu0 %v232
    %261 = vmatprep.subr.mxu0 0.0
    %262 = vmatpush1.msra.mxu0 %v231
    %263 = vmatprep.subr.mxu0 0.0
    %264 = vmatpush1.msra.mxu0 %v230
    %265 = vmatprep.subr.mxu0 0.0
    %266 = vmatpush1.msra.mxu0 %v229
    %267 = vmatprep.subr.mxu0 0.0
    %268 = vmatpush1.msra.mxu0 %v228
    %269 = vmatprep.subr.mxu0 0.0
    %270 = vmatpush1.msra.mxu0 %v227
    %271 = vmatprep.subr.mxu0 0.0
    %272 = vmatpush1.msra.mxu0 %v226
    %273 = vmatprep.subr.mxu0 0.0
    %274 = vmatpush1.msra.mxu0 %v225
    %275 = vmatprep.subr.mxu0 0.0
    %276 = vmatpush1.msra.mxu0 %v224
    %277 = vmatprep.subr.mxu0 0.0
    %278 = vmatpush1.msra.mxu0 %v223
    %279 = vmatprep.subr.mxu0 0.0
    %280 = vmatpush1.msra.mxu0 %v222
    %281 = vmatprep.subr.mxu0 0.0
    %282 = vmatpush1.msra.mxu0 %v221
    %283 = vmatprep.subr.mxu0 0.0
    %284 = vmatpush1.msra.mxu0 %v220
    %285 = vmatprep.subr.mxu0 0.0
    %286 = vmatpush1.msra.mxu0 %v219
    %287 = vmatprep.subr.mxu0 0.0
    %288 = vmatpush1.msra.mxu0 %v218
    %289 = vmatprep.subr.mxu0 0.0
    %290 = vmatpush2.msra.mxu0 %v249
    %291 = vmatprep.subr.mxu0 0.0
    %292 = vmatpush2.msra.mxu0 %v248
    %293 = vmatprep.subr.mxu0 0.0
    %294 = vmatpush2.msra.mxu0 %v247
    %295 = vmatprep.subr.mxu0 0.0
    %296 = vmatpush2.msra.mxu0 %v246
    %297 = vmatprep.subr.mxu0 0.0
    %298 = vmatpush2.msra.mxu0 %v245
    %299 = vmatprep.subr.mxu0 0.0
    %300 = vmatpush2.msra.mxu0 %v244
    %301 = vmatprep.subr.mxu0 0.0
    %302 = vmatpush2.msra.mxu0 %v243
    %303 = vmatprep.subr.mxu0 0.0
    %304 = vmatpush2.msra.mxu0 %v242
    %305 = vmatprep.subr.mxu0 0.0
    %306 = vmatpush2.msra.mxu0 %v241
    %307 = vmatprep.subr.mxu0 0.0
    %308 = vmatpush2.msra.mxu0 %v240
    %309 = vmatprep.subr.mxu0 0.0
    %310 = vmatpush2.msra.mxu0 %v239
    %311 = vmatprep.subr.mxu0 0.0
    %312 = vmatpush2.msra.mxu0 %v238
    %313 = vmatprep.subr.mxu0 0.0
    %314 = vmatpush2.msra.mxu0 %v237
    %315 = vmatprep.subr.mxu0 0.0
    %316 = vmatpush2.msra.mxu0 %v236
    %317 = vmatprep.subr.mxu0 0.0
    %318 = vmatpush2.msra.mxu0 %v235
    %319 = vmatprep.subr.mxu0 0.0
    %320 = vmatpush2.msra.mxu0 %v234
    %321 = vmatprep.mubr.f32.mxu0 %v217
    %322 = vmatmul.mubr.f32.gmra.mxu0 %v216
    %v323 = vpop.f32.mrf.mxu0
    %v324 = vadd.f32 %v255, %v323
    %v325 = vpop.f32.mrf.mxu0
    %326 = vdwg.mxu0
    %v327 = vmax.f32 %v324, 0.0
    %v328 = vld [vmem:[%s5] sm:$0xff]
    %v329 = vld [vmem:[%s5 + $0x8] sm:$0xff]
    %v330 = vld [vmem:[%s5 + $0x10] sm:$0xff]
    %v331 = vld [vmem:[%s5 + $0x18] sm:$0xff]
    %v332 = vld [vmem:[%s5 + $0x20] sm:$0xff]
    %v333 = vld [vmem:[%s5 + $0x28] sm:$0xff]
    %v334 = vld [vmem:[%s5 + $0x30] sm:$0xff]
    %v335 = vld [vmem:[%s5 + $0x38] sm:$0xff]
    %v336 = vld [vmem:[%s5 + $0x40] sm:$0xff]
    %v337 = vld [vmem:[%s5 + $0x48] sm:$0xff]
    %v338 = vld [vmem:[%s5 + $0x50] sm:$0xff]
    %v339 = vld [vmem:[%s5 + $0x58] sm:$0xff]
    %v340 = vld [vmem:[%s5 + $0x60] sm:$0xff]
    %v341 = vld [vmem:[%s5 + $0x68] sm:$0xff]
    %v342 = vld [vmem:[%s5 + $0x70] sm:$0xff]
    %v343 = vld [vmem:[%s5 + $0x78] sm:$0xff]
    %v344 = vld [vmem:[%s6] sm:$0x1]
    %v346 = vlaneseq
    %v347 = vshrl.u32 %v346, 7
    %v348 = vsub.s32 0, %v347
    %v349 = vrot.slane %v344, %v348
    %351 = vmatprep.subr.mxu0 0.0
    %352 = vmatpush1.msra.mxu0 %v343
    %353 = vmatprep.subr.mxu0 0.0
    %354 = vmatpush1.msra.mxu0 %v342
    %355 = vmatprep.subr.mxu0 0.0
    %356 = vmatpush1.msra.mxu0 %v341
    %357 = vmatprep.subr.mxu0 0.0
    %358 = vmatpush1.msra.mxu0 %v340
    %359 = vmatprep.subr.mxu0 0.0
    %360 = vmatpush1.msra.mxu0 %v339
    %361 = vmatprep.subr.mxu0 0.0
    %362 = vmatpush1.msra.mxu0 %v338
    %363 = vmatprep.subr.mxu0 0.0
    %364 = vmatpush1.msra.mxu0 %v337
    %365 = vmatprep.subr.mxu0 0.0
    %366 = vmatpush1.msra.mxu0 %v336
    %367 = vmatprep.subr.mxu0 0.0
    %368 = vmatpush1.msra.mxu0 %v335
    %369 = vmatprep.subr.mxu0 0.0
    %370 = vmatpush1.msra.mxu0 %v334
    %371 = vmatprep.subr.mxu0 0.0
    %372 = vmatpush1.msra.mxu0 %v333
    %373 = vmatprep.subr.mxu0 0.0
    %374 = vmatpush1.msra.mxu0 %v332
    %375 = vmatprep.subr.mxu0 0.0
    %376 = vmatpush1.msra.mxu0 %v331
    %377 = vmatprep.subr.mxu0 0.0
    %378 = vmatpush1.msra.mxu0 %v330
    %379 = vmatprep.subr.mxu0 0.0
    %380 = vmatpush1.msra.mxu0 %v329
    %381 = vmatprep.subr.mxu0 0.0
    %382 = vmatpush1.msra.mxu0 %v328
    %383 = vmatprep.subr.mxu0 0.0
    %384 = vmatpush2.msra.mxu0 0.0
    %385 = vmatprep.subr.mxu0 0.0
    %386 = vmatpush2.msra.mxu0 0.0
    %387 = vmatprep.subr.mxu0 0.0
    %388 = vmatpush2.msra.mxu0 0.0
    %389 = vmatprep.subr.mxu0 0.0
    %390 = vmatpush2.msra.mxu0 0.0
    %391 = vmatprep.subr.mxu0 0.0
    %392 = vmatpush2.msra.mxu0 0.0
    %393 = vmatprep.subr.mxu0 0.0
    %394 = vmatpush2.msra.mxu0 0.0
    %395 = vmatprep.subr.mxu0 0.0
    %396 = vmatpush2.msra.mxu0 0.0
    %397 = vmatprep.subr.mxu0 0.0
    %398 = vmatpush2.msra.mxu0 0.0
    %399 = vmatprep.subr.mxu0 0.0
    %400 = vmatpush2.msra.mxu0 0.0
    %401 = vmatprep.subr.mxu0 0.0
    %402 = vmatpush2.msra.mxu0 0.0
    %403 = vmatprep.subr.mxu0 0.0
    %404 = vmatpush2.msra.mxu0 0.0
    %405 = vmatprep.subr.mxu0 0.0
    %406 = vmatpush2.msra.mxu0 0.0
    %407 = vmatprep.subr.mxu0 0.0
    %408 = vmatpush2.msra.mxu0 0.0
    %409 = vmatprep.subr.mxu0 0.0
    %410 = vmatpush2.msra.mxu0 0.0
    %411 = vmatprep.subr.mxu0 0.0
    %412 = vmatpush2.msra.mxu0 0.0
    %413 = vmatprep.subr.mxu0 0.0
    %414 = vmatpush2.msra.mxu0 0.0
    %415 = vmatprep.mubr.f32.mxu0 0.0
    %416 = vmatmul.mubr.f32.gmra.mxu0 %v327
    %v417 = vpop.f32.mrf.mxu0
    %v418 = vadd.f32 %v349, %v417
    %v419 = vpop.f32.mrf.mxu0
    %420 = vdwg.mxu0
    %v421 = vmax.f32 %v418, 0.0
    %v422 = vld [vmem:[%s7] sm:$0xff]
    %v423 = vld [vmem:[%s7 + $0x8] sm:$0xff]
    %v424 = vld [vmem:[%s7 + $0x10] sm:$0xff]
    %v425 = vld [vmem:[%s7 + $0x18] sm:$0xff]
    %v426 = vld [vmem:[%s7 + $0x20] sm:$0xff]
    %v427 = vld [vmem:[%s7 + $0x28] sm:$0xff]
    %v428 = vld [vmem:[%s7 + $0x30] sm:$0xff]
    %v429 = vld [vmem:[%s7 + $0x38] sm:$0xff]
    %v430 = vld [vmem:[%s8] sm:$0x1]
    %v432 = vlaneseq
    %v433 = vshrl.u32 %v432, 7
    %v434 = vsub.s32 0, %v433
    %v435 = vrot.slane %v430, %v434
    %vm437 = vcmask 523264
    %v439 = vsel %vm437, %v421, 0
    %441 = vmatprep.subr.mxu0 0.0
    %442 = vmatpush1.msra.mxu0 0.0
    %443 = vmatprep.subr.mxu0 0.0
    %444 = vmatpush1.msra.mxu0 0.0
    %445 = vmatprep.subr.mxu0 0.0
    %446 = vmatpush1.msra.mxu0 0.0
    %447 = vmatprep.subr.mxu0 0.0
    %448 = vmatpush1.msra.mxu0 0.0
    %449 = vmatprep.subr.mxu0 0.0
    %450 = vmatpush1.msra.mxu0 0.0
    %451 = vmatprep.subr.mxu0 0.0
    %452 = vmatpush1.msra.mxu0 0.0
    %453 = vmatprep.subr.mxu0 0.0
    %454 = vmatpush1.msra.mxu0 0.0
    %455 = vmatprep.subr.mxu0 0.0
    %456 = vmatpush1.msra.mxu0 0.0
    %457 = vmatprep.subr.mxu0 0.0
    %458 = vmatpush1.msra.mxu0 %v429
    %459 = vmatprep.subr.mxu0 0.0
    %460 = vmatpush1.msra.mxu0 %v428
    %461 = vmatprep.subr.mxu0 0.0
    %462 = vmatpush1.msra.mxu0 %v427
    %463 = vmatprep.subr.mxu0 0.0
    %464 = vmatpush1.msra.mxu0 %v426
    %465 = vmatprep.subr.mxu0 0.0
    %466 = vmatpush1.msra.mxu0 %v425
    %467 = vmatprep.subr.mxu0 0.0
    %468 = vmatpush1.msra.mxu0 %v424
    %469 = vmatprep.subr.mxu0 0.0
    %470 = vmatpush1.msra.mxu0 %v423
    %471 = vmatprep.subr.mxu0 0.0
    %472 = vmatpush1.msra.mxu0 %v422
    %473 = vmatprep.subr.mxu0 0.0
    %474 = vmatpush2.msra.mxu0 0.0
    %475 = vmatprep.subr.mxu0 0.0
    %476 = vmatpush2.msra.mxu0 0.0
    %477 = vmatprep.subr.mxu0 0.0
    %478 = vmatpush2.msra.mxu0 0.0
    %479 = vmatprep.subr.mxu0 0.0
    %480 = vmatpush2.msra.mxu0 0.0
    %481 = vmatprep.subr.mxu0 0.0
    %482 = vmatpush2.msra.mxu0 0.0
    %483 = vmatprep.subr.mxu0 0.0
    %484 = vmatpush2.msra.mxu0 0.0
    %485 = vmatprep.subr.mxu0 0.0
    %486 = vmatpush2.msra.mxu0 0.0
    %487 = vmatprep.subr.mxu0 0.0
    %488 = vmatpush2.msra.mxu0 0.0
    %489 = vmatprep.subr.mxu0 0.0
    %490 = vmatpush2.msra.mxu0 0.0
    %491 = vmatprep.subr.mxu0 0.0
    %492 = vmatpush2.msra.mxu0 0.0
    %493 = vmatprep.subr.mxu0 0.0
    %494 = vmatpush2.msra.mxu0 0.0
    %495 = vmatprep.subr.mxu0 0.0
    %496 = vmatpush2.msra.mxu0 0.0
    %497 = vmatprep.subr.mxu0 0.0
    %498 = vmatpush2.msra.mxu0 0.0
    %499 = vmatprep.subr.mxu0 0.0
    %500 = vmatpush2.msra.mxu0 0.0
    %501 = vmatprep.subr.mxu0 0.0
    %502 = vmatpush2.msra.mxu0 0.0
    %503 = vmatprep.subr.mxu0 0.0
    %504 = vmatpush2.msra.mxu0 0.0
    %505 = vmatprep.mubr.f32.mxu0 0.0
    %506 = vmatmul.mubr.f32.gmra.mxu0 %v439
    %v507 = vpop.f32.mrf.mxu0
    %v508 = vadd.f32 %v435, %v507
    %v509 = vpop.f32.mrf.mxu0
    %510 = vdwg.mxu0
    %v511 = vmax.f32 %v508, 0.0
    %v512 = vld [vmem:[#allocation5] sm:$0xff]
    %v513 = vld [vmem:[#allocation5 + $0x8] sm:$0xff]
    %v514 = vld [vmem:[#allocation5 + $0x10] sm:$0xff]
    %v515 = vld [vmem:[#allocation5 + $0x18] sm:$0xff]
    %v516 = vld [vmem:[%s10] sm:$0x1]
    %v518 = vlaneseq
    %v519 = vshrl.u32 %v518, 7
    %v520 = vsub.s32 0, %v519
    %v521 = vrot.slane %v516, %v520
    %vm523 = vcmask 261120
    %v525 = vsel %vm523, %v511, 0
    %527 = vmatprep.subr.mxu0 0.0
    %528 = vmatpush1.msra.mxu0 0.0
    %529 = vmatprep.subr.mxu0 0.0
    %530 = vmatpush1.msra.mxu0 0.0
    %531 = vmatprep.subr.mxu0 0.0
    %532 = vmatpush1.msra.mxu0 0.0
    %533 = vmatprep.subr.mxu0 0.0
    %534 = vmatpush1.msra.mxu0 0.0
    %535 = vmatprep.subr.mxu0 0.0
    %536 = vmatpush1.msra.mxu0 0.0
    %537 = vmatprep.subr.mxu0 0.0
    %538 = vmatpush1.msra.mxu0 0.0
    %539 = vmatprep.subr.mxu0 0.0
    %540 = vmatpush1.msra.mxu0 0.0
    %541 = vmatprep.subr.mxu0 0.0
    %542 = vmatpush1.msra.mxu0 0.0
    %543 = vmatprep.subr.mxu0 0.0
    %544 = vmatpush1.msra.mxu0 0.0
    %545 = vmatprep.subr.mxu0 0.0
    %546 = vmatpush1.msra.mxu0 0.0
    %547 = vmatprep.subr.mxu0 0.0
    %548 = vmatpush1.msra.mxu0 0.0
    %549 = vmatprep.subr.mxu0 0.0
    %550 = vmatpush1.msra.mxu0 0.0
    %551 = vmatprep.subr.mxu0 0.0
    %552 = vmatpush1.msra.mxu0 %v515
    %553 = vmatprep.subr.mxu0 0.0
    %554 = vmatpush1.msra.mxu0 %v514
    %555 = vmatprep.subr.mxu0 0.0
    %556 = vmatpush1.msra.mxu0 %v513
    %557 = vmatprep.subr.mxu0 0.0
    %558 = vmatpush1.msra.mxu0 %v512
    %559 = vmatprep.subr.mxu0 0.0
    %560 = vmatpush2.msra.mxu0 0.0
    %561 = vmatprep.subr.mxu0 0.0
    %562 = vmatpush2.msra.mxu0 0.0
    %563 = vmatprep.subr.mxu0 0.0
    %564 = vmatpush2.msra.mxu0 0.0
    %565 = vmatprep.subr.mxu0 0.0
    %566 = vmatpush2.msra.mxu0 0.0
    %567 = vmatprep.subr.mxu0 0.0
    %568 = vmatpush2.msra.mxu0 0.0
    %569 = vmatprep.subr.mxu0 0.0
    %570 = vmatpush2.msra.mxu0 0.0
    %571 = vmatprep.subr.mxu0 0.0
    %572 = vmatpush2.msra.mxu0 0.0
    %573 = vmatprep.subr.mxu0 0.0
    %574 = vmatpush2.msra.mxu0 0.0
    %575 = vmatprep.subr.mxu0 0.0
    %576 = vmatpush2.msra.mxu0 0.0
    %577 = vmatprep.subr.mxu0 0.0
    %578 = vmatpush2.msra.mxu0 0.0
    %579 = vmatprep.subr.mxu0 0.0
    %580 = vmatpush2.msra.mxu0 0.0
    %581 = vmatprep.subr.mxu0 0.0
    %582 = vmatpush2.msra.mxu0 0.0
    %583 = vmatprep.subr.mxu0 0.0
    %584 = vmatpush2.msra.mxu0 0.0
    %585 = vmatprep.subr.mxu0 0.0
    %586 = vmatpush2.msra.mxu0 0.0
    %587 = vmatprep.subr.mxu0 0.0
    %588 = vmatpush2.msra.mxu0 0.0
    %589 = vmatprep.subr.mxu0 0.0
    %590 = vmatpush2.msra.mxu0 0.0
    %591 = vmatprep.mubr.f32.mxu0 0.0
    %592 = vmatmul.mubr.f32.gmra.mxu0 %v525
    %v593 = vpop.f32.mrf.mxu0
    %v594 = vadd.f32 %v521, %v593
    %v595 = vpop.f32.mrf.mxu0
    %596 = vdwg.mxu0
    %597 = vst [vmem:[#allocation7] sm:$0xff] %v594
    // Predicated region
    $region54: #{policy_network_forward.1} parent=1 // pred_check
      _
    $region55: #{policy_network_forward.1} parent=1 // pred_check_branch
      %599 = sbr.rel (0) target = $region57
    $region56: #{policy_network_forward.1} parent=1 // pred_region
      %s601 = ssub.s32 128, 128
      %602 = vsyncadd [#allocation4], %s601
      %s604 = sshll.u32 [#allocation7], 4
      %s605 = int_to_ptr.vmem [resolvable:$true] %s604
      %607 = dma.vmem_to_hbm [thread:$0]  %s605, 128, %s11, [#allocation4]
    $region57: #{policy_network_forward.1} parent=1 // pred_fallthru
      _
    // Predicated region
    $region58: #{policy_network_forward.1} parent=1 // pred_check
      _
    $region59: #{policy_network_forward.1} parent=1 // pred_check_branch
      %609 = sbr.rel (0) target = $region61
    $region60: #{policy_network_forward.1} parent=1 // pred_region
      %610 = dma.done [#allocation4], 128
    $region61: #{policy_network_forward.1} parent=1 // pred_fallthru
      _
    %611 = vsyncpa [#allocation3], 1
    %612 = vsyncpa [#allocation6], 1
    %613 = vsyncpa [#allocation4], 1

</llo_original>
